<compile_context>
chip_gen: v5e
topology: v5e:2x2
jax: 0.10.0
libtpu: 0.0.40
codegen_flags: <defaults>
</compile_context>

<pallas_src>
import functools

import jax
import jax.numpy as jnp
from jax.experimental import pallas as pl
from jax.experimental.pallas import tpu as pltpu


def _sigmoid(x):
    # tanh form: one EUP transcendental per layer; the VALU mul/add hide under it.
    return 0.5 * jnp.tanh(0.5 * x) + 0.5


def make_autoencoder_kernel(n):
    """n = input_size; every layer is a uniform zero-padded (n, n) matmul."""

    def kernel(x_ref, p_ref, out_ref):
        def layer(h, i, activate):
            # i is a static Python int -> zero-cost Ref views; uniform (n, n)
            # shapes keep a single stable layout across all layers.
            w = p_ref[i, 0:n, :]          # (n, n) pre-transposed (in, out), zero-padded
            b = p_ref[i, n:n + 1, :]      # (1, n) bias row -> sublane broadcast
            y = jnp.dot(h, w, preferred_element_type=jnp.float32) + b
            return _sigmoid(y) if activate else y

        h = x_ref[...]
        # ---- encoder ----
        h = layer(h, 0, True)
        h1 = layer(h, 1, True)
        # Bottleneck projection (no activation): independent matmul, off the
        # critical path; cols [bottleneck, n) are exactly zero by construction.
        enc = layer(h1, 2, False)
        # ---- decoder (bottleneck already folded into slab 3: W23 = W2 @ W3) ----
        h = layer(h1, 3, True)
        h = layer(h, 4, True)
        dec = layer(h, 5, True)

        # Single lane-dense (B, 2n) output slab: dec in lanes [0, n), enc in [n, 2n).
        out_ref[...] = jnp.concatenate([dec, enc], axis=-1).astype(out_ref.dtype)

    return kernel


@functools.partial(jax.jit, static_argnames=("bottleneck",))
def autoencoder_forward(x, packed, bottleneck):
    B, N = x.shape
    kernel = make_autoencoder_kernel(N)
    vmem = pl.BlockSpec(memory_space=pltpu.MemorySpace.VMEM)

    # Advisory cost hint for XLA's scheduler (kernel is overhead-bound).
    flops = 2 * B * 6 * N * N
    transcendentals = 5 * B * N
    bytes_accessed = 4 * (x.size + packed.size + B * 2 * N)
    cost = pl.CostEstimate(
        flops=flops, transcendentals=transcendentals, bytes_accessed=bytes_accessed
    )

    out = pl.pallas_call(
        kernel,
        out_shape=jax.ShapeDtypeStruct((B, 2 * N), jnp.float32),
        in_specs=[vmem, vmem],
        out_specs=vmem,
        cost_estimate=cost,
    )(x, packed)

    decoded = out[:, :N]
    encoded = out[:, N:N + bottleneck]
    return encoded, decoded


def init_params(key, input_size):
    """Deterministic init matching the PyTorch module's layer shapes.
    W is stored torch-style as (out_features, in_features)."""
    sizes = [
        (input_size, input_size // 2),
        (input_size // 2, input_size // 4),
        (input_size // 4, input_size // 8),
        (input_size // 8, input_size // 4),
        (input_size // 4, input_size // 2),
        (input_size // 2, input_size),
    ]
    params = []
    for (fan_in, fan_out) in sizes:
        key, kw, kb = jax.random.split(key, 3)
        bound = 1.0 / jnp.sqrt(fan_in)
        # torch.nn.Linear default init: U(-1/sqrt(fan_in), 1/sqrt(fan_in))
        w = jax.random.uniform(kw, (fan_out, fan_in), jnp.float32, -bound, bound)
        b = jax.random.uniform(kb, (fan_out,), jnp.float32, -bound, bound)
        params.append((w, b))
    return params


def pack_params(params, input_size):
    """One-time, off-hot-path packing:
      * pre-transpose each torch-style (out, in) W to (in, out),
      * zero-pad every layer to a uniform (N, N) slab,
      * fold the un-activated bottleneck Linear into the first decoder Linear
        (W23 = W2 @ W3, b23 = b2 @ W3 + b3) to shorten the serial MXU chain,
      * fold each bias into row N of its slab (rows padded to a multiple of 8),
      * stack everything into a single (6, N+8, N) cube -> one weight DMA.
    """
    N = input_size

    def pad_w(w):  # w is torch-style (out, in)
        fout, fin = w.shape
        return jnp.zeros((N, N), jnp.float32).at[:fin, :fout].set(w.T)

    def pad_b(b):
        return jnp.zeros((N,), jnp.float32).at[: b.shape[0]].set(b)

    Ws = [pad_w(w) for (w, _) in params]
    Bs = [pad_b(b) for (_, b) in params]

    # Fold layer 2 (bottleneck, no activation) into layer 3:
    #   (h @ W2 + b2) @ W3 + b3 == h @ (W2 @ W3) + (b2 @ W3 + b3)
    W23 = Ws[2] @ Ws[3]
    b23 = Bs[2] @ Ws[3] + Bs[3]

    slabs = [
        (Ws[0], Bs[0]),
        (Ws[1], Bs[1]),
        (Ws[2], Bs[2]),   # bottleneck projection itself (for the `encoded` output)
        (W23, b23),       # folded first decoder layer
        (Ws[4], Bs[4]),
        (Ws[5], Bs[5]),
    ]
    R = N + 8  # bias lives in row N; rows N+1 .. N+7 are zero padding
    packed = jnp.zeros((len(slabs), R, N), jnp.float32)
    for i, (w, b) in enumerate(slabs):
        packed = packed.at[i, :N, :].set(w)
        packed = packed.at[i, N, :].set(b)
    return packed


def reference_forward(x, params):
    """Pure-JAX reference for correctness checking (torch semantics)."""

    def lin(h, w, b):
        return h @ w.T + b

    h = jax.nn.sigmoid(lin(x, *params[0]))
    h = jax.nn.sigmoid(lin(h, *params[1]))
    enc = lin(h, *params[2])
    h = jax.nn.sigmoid(lin(enc, *params[3]))
    h = jax.nn.sigmoid(lin(h, *params[4]))
    dec = jax.nn.sigmoid(lin(h, *params[5]))
    return enc, dec


if __name__ == "__main__":
    key = jax.random.PRNGKey(0)
    B = 8
    INPUT_SIZE = 64  # must be divisible by 8 (input_size/8 bottleneck)

    key, kx, kp = jax.random.split(key, 3)
    x = jax.random.normal(kx, (B, INPUT_SIZE), jnp.float32)
    params = init_params(kp, INPUT_SIZE)

    packed = pack_params(params, INPUT_SIZE)
    bottleneck = INPUT_SIZE // 8

    encoded, decoded = autoencoder_forward(x, packed, bottleneck)
    jax.block_until_ready((encoded, decoded))

    enc_ref, dec_ref = reference_forward(x, params)
    assert encoded.shape == (B, bottleneck)
    assert decoded.shape == (B, INPUT_SIZE)
    assert jnp.allclose(encoded, enc_ref, atol=1e-4, rtol=1e-4)
    assert jnp.allclose(decoded, dec_ref, atol=1e-4, rtol=1e-4)

    print("KERNEL_OK")
</pallas_src>

<mosaic_0001>
module attributes {stable_mosaic.version = 11 : i64} {
  func.func @kernel(%arg0: memref<8x64xf32, #tpu.memory_space<vmem>>, %arg1: memref<6x72x64xf32, #tpu.memory_space<vmem>>, %arg2: memref<8x128xf32, #tpu.memory_space<vmem>>) attributes {dimension_semantics = [], scalar_prefetch = 0 : i64, scratch_operands = 0 : i64, tpu.core_type = #tpu.core_type<tc>} {
    %c0 = arith.constant 0 : index
    %c0_0 = arith.constant 0 : index
    %0 = vector.load %arg0[%c0, %c0_0] : memref<8x64xf32, #tpu.memory_space<vmem>>, vector<8x64xf32>
    %c0_1 = arith.constant 0 : index
    %c0_2 = arith.constant 0 : index
    %c0_3 = arith.constant 0 : index
    %1 = vector.load %arg1[%c0_1, %c0_2, %c0_3] : memref<6x72x64xf32, #tpu.memory_space<vmem>>, vector<1x64x64xf32>
    %2 = vector.shape_cast %1 : vector<1x64x64xf32> to vector<64x64xf32>
    %c0_4 = arith.constant 0 : index
    %c64 = arith.constant 64 : index
    %c0_5 = arith.constant 0 : index
    %3 = vector.load %arg1[%c0_4, %c64, %c0_5] : memref<6x72x64xf32, #tpu.memory_space<vmem>>, vector<1x1x64xf32>
    %4 = vector.shape_cast %3 : vector<1x1x64xf32> to vector<1x64xf32>
    %cst = arith.constant dense<0.000000e+00> : vector<8x64xf32>
    %5 = tpu.matmul %0, %2, %cst {dimension_numbers = #tpu.dot_dimension_numbers<[1], [0], [0], [1], [0, 0, 1, 1], [], []>} : vector<8x64xf32>, vector<64x64xf32>, vector<8x64xf32> -> vector<8x64xf32>
    %6 = vector.broadcast %4 : vector<1x64xf32> to vector<8x64xf32>
    %7 = arith.addf %5, %6 : vector<8x64xf32>
    %cst_6 = arith.constant 5.000000e-01 : f32
    %8 = vector.broadcast %cst_6 : f32 to vector<8x64xf32>
    %9 = arith.mulf %8, %7 : vector<8x64xf32>
    %10 = math.tanh %9 : vector<8x64xf32>
    %cst_7 = arith.constant 5.000000e-01 : f32
    %11 = vector.broadcast %cst_7 : f32 to vector<8x64xf32>
    %12 = arith.mulf %11, %10 : vector<8x64xf32>
    %cst_8 = arith.constant 5.000000e-01 : f32
    %13 = vector.broadcast %cst_8 : f32 to vector<8x64xf32>
    %14 = arith.addf %12, %13 : vector<8x64xf32>
    %c1 = arith.constant 1 : index
    %c0_9 = arith.constant 0 : index
    %c0_10 = arith.constant 0 : index
    %15 = vector.load %arg1[%c1, %c0_9, %c0_10] : memref<6x72x64xf32, #tpu.memory_space<vmem>>, vector<1x64x64xf32>
    %16 = vector.shape_cast %15 : vector<1x64x64xf32> to vector<64x64xf32>
    %c1_11 = arith.constant 1 : index
    %c64_12 = arith.constant 64 : index
    %c0_13 = arith.constant 0 : index
    %17 = vector.load %arg1[%c1_11, %c64_12, %c0_13] : memref<6x72x64xf32, #tpu.memory_space<vmem>>, vector<1x1x64xf32>
    %18 = vector.shape_cast %17 : vector<1x1x64xf32> to vector<1x64xf32>
    %cst_14 = arith.constant dense<0.000000e+00> : vector<8x64xf32>
    %19 = tpu.matmul %14, %16, %cst_14 {dimension_numbers = #tpu.dot_dimension_numbers<[1], [0], [0], [1], [0, 0, 1, 1], [], []>} : vector<8x64xf32>, vector<64x64xf32>, vector<8x64xf32> -> vector<8x64xf32>
    %20 = vector.broadcast %18 : vector<1x64xf32> to vector<8x64xf32>
    %21 = arith.addf %19, %20 : vector<8x64xf32>
    %cst_15 = arith.constant 5.000000e-01 : f32
    %22 = vector.broadcast %cst_15 : f32 to vector<8x64xf32>
    %23 = arith.mulf %22, %21 : vector<8x64xf32>
    %24 = math.tanh %23 : vector<8x64xf32>
    %cst_16 = arith.constant 5.000000e-01 : f32
    %25 = vector.broadcast %cst_16 : f32 to vector<8x64xf32>
    %26 = arith.mulf %25, %24 : vector<8x64xf32>
    %cst_17 = arith.constant 5.000000e-01 : f32
    %27 = vector.broadcast %cst_17 : f32 to vector<8x64xf32>
    %28 = arith.addf %26, %27 : vector<8x64xf32>
    %c2 = arith.constant 2 : index
    %c0_18 = arith.constant 0 : index
    %c0_19 = arith.constant 0 : index
    %29 = vector.load %arg1[%c2, %c0_18, %c0_19] : memref<6x72x64xf32, #tpu.memory_space<vmem>>, vector<1x64x64xf32>
    %30 = vector.shape_cast %29 : vector<1x64x64xf32> to vector<64x64xf32>
    %c2_20 = arith.constant 2 : index
    %c64_21 = arith.constant 64 : index
    %c0_22 = arith.constant 0 : index
    %31 = vector.load %arg1[%c2_20, %c64_21, %c0_22] : memref<6x72x64xf32, #tpu.memory_space<vmem>>, vector<1x1x64xf32>
    %32 = vector.shape_cast %31 : vector<1x1x64xf32> to vector<1x64xf32>
    %cst_23 = arith.constant dense<0.000000e+00> : vector<8x64xf32>
    %33 = tpu.matmul %28, %30, %cst_23 {dimension_numbers = #tpu.dot_dimension_numbers<[1], [0], [0], [1], [0, 0, 1, 1], [], []>} : vector<8x64xf32>, vector<64x64xf32>, vector<8x64xf32> -> vector<8x64xf32>
    %34 = vector.broadcast %32 : vector<1x64xf32> to vector<8x64xf32>
    %35 = arith.addf %33, %34 : vector<8x64xf32>
    %c3 = arith.constant 3 : index
    %c0_24 = arith.constant 0 : index
    %c0_25 = arith.constant 0 : index
    %36 = vector.load %arg1[%c3, %c0_24, %c0_25] : memref<6x72x64xf32, #tpu.memory_space<vmem>>, vector<1x64x64xf32>
    %37 = vector.shape_cast %36 : vector<1x64x64xf32> to vector<64x64xf32>
    %c3_26 = arith.constant 3 : index
    %c64_27 = arith.constant 64 : index
    %c0_28 = arith.constant 0 : index
    %38 = vector.load %arg1[%c3_26, %c64_27, %c0_28] : memref<6x72x64xf32, #tpu.memory_space<vmem>>, vector<1x1x64xf32>
    %39 = vector.shape_cast %38 : vector<1x1x64xf32> to vector<1x64xf32>
    %cst_29 = arith.constant dense<0.000000e+00> : vector<8x64xf32>
    %40 = tpu.matmul %28, %37, %cst_29 {dimension_numbers = #tpu.dot_dimension_numbers<[1], [0], [0], [1], [0, 0, 1, 1], [], []>} : vector<8x64xf32>, vector<64x64xf32>, vector<8x64xf32> -> vector<8x64xf32>
    %41 = vector.broadcast %39 : vector<1x64xf32> to vector<8x64xf32>
    %42 = arith.addf %40, %41 : vector<8x64xf32>
    %cst_30 = arith.constant 5.000000e-01 : f32
    %43 = vector.broadcast %cst_30 : f32 to vector<8x64xf32>
    %44 = arith.mulf %43, %42 : vector<8x64xf32>
    %45 = math.tanh %44 : vector<8x64xf32>
    %cst_31 = arith.constant 5.000000e-01 : f32
    %46 = vector.broadcast %cst_31 : f32 to vector<8x64xf32>
    %47 = arith.mulf %46, %45 : vector<8x64xf32>
    %cst_32 = arith.constant 5.000000e-01 : f32
    %48 = vector.broadcast %cst_32 : f32 to vector<8x64xf32>
    %49 = arith.addf %47, %48 : vector<8x64xf32>
    %c4 = arith.constant 4 : index
    %c0_33 = arith.constant 0 : index
    %c0_34 = arith.constant 0 : index
    %50 = vector.load %arg1[%c4, %c0_33, %c0_34] : memref<6x72x64xf32, #tpu.memory_space<vmem>>, vector<1x64x64xf32>
    %51 = vector.shape_cast %50 : vector<1x64x64xf32> to vector<64x64xf32>
    %c4_35 = arith.constant 4 : index
    %c64_36 = arith.constant 64 : index
    %c0_37 = arith.constant 0 : index
    %52 = vector.load %arg1[%c4_35, %c64_36, %c0_37] : memref<6x72x64xf32, #tpu.memory_space<vmem>>, vector<1x1x64xf32>
    %53 = vector.shape_cast %52 : vector<1x1x64xf32> to vector<1x64xf32>
    %cst_38 = arith.constant dense<0.000000e+00> : vector<8x64xf32>
    %54 = tpu.matmul %49, %51, %cst_38 {dimension_numbers = #tpu.dot_dimension_numbers<[1], [0], [0], [1], [0, 0, 1, 1], [], []>} : vector<8x64xf32>, vector<64x64xf32>, vector<8x64xf32> -> vector<8x64xf32>
    %55 = vector.broadcast %53 : vector<1x64xf32> to vector<8x64xf32>
    %56 = arith.addf %54, %55 : vector<8x64xf32>
    %cst_39 = arith.constant 5.000000e-01 : f32
    %57 = vector.broadcast %cst_39 : f32 to vector<8x64xf32>
    %58 = arith.mulf %57, %56 : vector<8x64xf32>
    %59 = math.tanh %58 : vector<8x64xf32>
    %cst_40 = arith.constant 5.000000e-01 : f32
    %60 = vector.broadcast %cst_40 : f32 to vector<8x64xf32>
    %61 = arith.mulf %60, %59 : vector<8x64xf32>
    %cst_41 = arith.constant 5.000000e-01 : f32
    %62 = vector.broadcast %cst_41 : f32 to vector<8x64xf32>
    %63 = arith.addf %61, %62 : vector<8x64xf32>
    %c5 = arith.constant 5 : index
    %c0_42 = arith.constant 0 : index
    %c0_43 = arith.constant 0 : index
    %64 = vector.load %arg1[%c5, %c0_42, %c0_43] : memref<6x72x64xf32, #tpu.memory_space<vmem>>, vector<1x64x64xf32>
    %65 = vector.shape_cast %64 : vector<1x64x64xf32> to vector<64x64xf32>
    %c5_44 = arith.constant 5 : index
    %c64_45 = arith.constant 64 : index
    %c0_46 = arith.constant 0 : index
    %66 = vector.load %arg1[%c5_44, %c64_45, %c0_46] : memref<6x72x64xf32, #tpu.memory_space<vmem>>, vector<1x1x64xf32>
    %67 = vector.shape_cast %66 : vector<1x1x64xf32> to vector<1x64xf32>
    %cst_47 = arith.constant dense<0.000000e+00> : vector<8x64xf32>
    %68 = tpu.matmul %63, %65, %cst_47 {dimension_numbers = #tpu.dot_dimension_numbers<[1], [0], [0], [1], [0, 0, 1, 1], [], []>} : vector<8x64xf32>, vector<64x64xf32>, vector<8x64xf32> -> vector<8x64xf32>
    %69 = vector.broadcast %67 : vector<1x64xf32> to vector<8x64xf32>
    %70 = arith.addf %68, %69 : vector<8x64xf32>
    %cst_48 = arith.constant 5.000000e-01 : f32
    %71 = vector.broadcast %cst_48 : f32 to vector<8x64xf32>
    %72 = arith.mulf %71, %70 : vector<8x64xf32>
    %73 = math.tanh %72 : vector<8x64xf32>
    %cst_49 = arith.constant 5.000000e-01 : f32
    %74 = vector.broadcast %cst_49 : f32 to vector<8x64xf32>
    %75 = arith.mulf %74, %73 : vector<8x64xf32>
    %cst_50 = arith.constant 5.000000e-01 : f32
    %76 = vector.broadcast %cst_50 : f32 to vector<8x64xf32>
    %77 = arith.addf %75, %76 : vector<8x64xf32>
    %78 = tpu.concatenate %77, %35 in 1 : vector<8x64xf32>, vector<8x64xf32> -> vector<8x128xf32>
    %c0_51 = arith.constant 0 : index
    %c0_52 = arith.constant 0 : index
    %79 = vector.load %arg2[%c0_51, %c0_52] : memref<8x128xf32, #tpu.memory_space<vmem>>, vector<8x128xf32>
    tpu.vector_store %arg2[%c0_51, %c0_52], %78 {strides = array<i32>} : memref<8x128xf32, #tpu.memory_space<vmem>>, vector<8x128xf32>,
    return
  }
}

</mosaic_0001>

<llo_original>
// kernel: autoencoder_forward.1
$region0: #{autoencoder_forward.1}
  #allocation0 [shape = 'u32[]', space=smem, size = 0x4, offset = 0x4, fixed_abs, tag = 'smem constant byte address 0x4 - core index']
  #allocation1 [shape = 'u32[72,128]{1,0:T(1,128)}', space=vmem, size = 0x9000, scoped, tag = 'internal scratch']
  %s0 = inlined_call_operand.vmem [shape: f32[8,64], index: 0, kind: input, shape index: {}]
  %s1 = inlined_call_operand.vmem [shape: f32[6,72,64], index: 1, kind: input, shape index: {}]
  %s2 = inlined_call_operand.vmem [shape: f32[8,128], index: 2, kind: output, shape index: {}]
  %s3 = sld [smem:[#allocation0]]
  $region18: #{autoencoder_forward.1} parent=0
    _
  %s5 = ssub.s32 1, %s3
  %s6 = scalar_select 0, %s5, %s3
  // Predicated region
  $region2: #{autoencoder_forward.1} parent=0 // pred_check
    _
  $region3: #{autoencoder_forward.1} parent=0 // pred_check_branch
    %8 = sbr.rel (0) target = $region5
  $region4: #{autoencoder_forward.1} parent=0 // pred_region
    _
  $region5: #{autoencoder_forward.1} parent=0 // pred_fallthru
    _
  // Predicated region
  $region6: #{autoencoder_forward.1} parent=0 // pred_check
    _
  $region7: #{autoencoder_forward.1} parent=0 // pred_check_branch
    %10 = sbr.rel (0) target = $region9
  $region8: #{autoencoder_forward.1} parent=0 // pred_region
    _
  $region9: #{autoencoder_forward.1} parent=0 // pred_fallthru
    _
  %v11 = vld [vmem:[%s0] sm:$0xff]
  %v12 = vld [vmem:[%s1] sm:$0xff]
  %v13 = vld [vmem:[%s1 + $0x8] sm:$0xff]
  %v14 = vld [vmem:[%s1 + $0x10] sm:$0xff]
  %v15 = vld [vmem:[%s1 + $0x18] sm:$0xff]
  %v16 = vld [vmem:[%s1 + $0x20] sm:$0xff]
  %v17 = vld [vmem:[%s1 + $0x28] sm:$0xff]
  %v18 = vld [vmem:[%s1 + $0x30] sm:$0xff]
  %v19 = vld [vmem:[%s1 + $0x38] sm:$0xff]
  %v20 = vld [vmem:[%s1 + $0x40] sm:$0x1]
  %v21 = vperm.slane %v20, 0
  %vm22 = vcmask 523264
  %v24 = vsel %vm22, %v11, 0
  %26 = vmatpush.msra.mxu0 0.0
  %27 = vmatpush.msra.mxu0 0.0
  %28 = vmatpush.msra.mxu0 0.0
  %29 = vmatpush.msra.mxu0 0.0
  %30 = vmatpush.msra.mxu0 0.0
  %31 = vmatpush.msra.mxu0 0.0
  %32 = vmatpush.msra.mxu0 0.0
  %33 = vmatpush.msra.mxu0 0.0
  %34 = vmatpush.msra.mxu0 %v19
  %35 = vmatpush.msra.mxu0 %v18
  %36 = vmatpush.msra.mxu0 %v17
  %37 = vmatpush.msra.mxu0 %v16
  %38 = vmatpush.msra.mxu0 %v15
  %39 = vmatpush.msra.mxu0 %v14
  %40 = vmatpush.msra.mxu0 %v13
  %41 = vmatpush.msra.mxu0 %v12
  %42 = vmatmul.f32.gmra.mxu0 %v24
  %v43 = vpop.f32.mrf.mxu0
  %v44 = vadd.f32 %v21, %v43
  %45 = vdwg.mxu0
  %v46 = vmul.f32 %v44, 0.5
  %v47 = vtanh.pop %v46
  %v48 = vmul.f32 %v47, 0.5
  %v49 = vadd.f32 %v48, 0.5
  %s50 = scalar_lea.vmem %s1, 72
  %v51 = vld [vmem:[%s50] sm:$0xff]
  %v52 = vld [vmem:[%s50 + $0x8] sm:$0xff]
  %v53 = vld [vmem:[%s50 + $0x10] sm:$0xff]
  %v54 = vld [vmem:[%s50 + $0x18] sm:$0xff]
  %v55 = vld [vmem:[%s50 + $0x20] sm:$0xff]
  %v56 = vld [vmem:[%s50 + $0x28] sm:$0xff]
  %v57 = vld [vmem:[%s50 + $0x30] sm:$0xff]
  %v58 = vld [vmem:[%s50 + $0x38] sm:$0xff]
  %v59 = vld [vmem:[%s50 + $0x40] sm:$0x1]
  %v60 = vperm.slane %v59, 0
  %v62 = vsel %vm22, %v49, 0
  %64 = vmatpush.msra.mxu0 0.0
  %65 = vmatpush.msra.mxu0 0.0
  %66 = vmatpush.msra.mxu0 0.0
  %67 = vmatpush.msra.mxu0 0.0
  %68 = vmatpush.msra.mxu0 0.0
  %69 = vmatpush.msra.mxu0 0.0
  %70 = vmatpush.msra.mxu0 0.0
  %71 = vmatpush.msra.mxu0 0.0
  %72 = vmatpush.msra.mxu0 %v58
  %73 = vmatpush.msra.mxu0 %v57
  %74 = vmatpush.msra.mxu0 %v56
  %75 = vmatpush.msra.mxu0 %v55
  %76 = vmatpush.msra.mxu0 %v54
  %77 = vmatpush.msra.mxu0 %v53
  %78 = vmatpush.msra.mxu0 %v52
  %79 = vmatpush.msra.mxu0 %v51
  %80 = vmatmul.f32.gmra.mxu0 %v62
  %v81 = vpop.f32.mrf.mxu0
  %v82 = vadd.f32 %v60, %v81
  %83 = vdwg.mxu0
  %v84 = vmul.f32 %v82, 0.5
  %v85 = vtanh.pop %v84
  %v86 = vmul.f32 %v85, 0.5
  %v87 = vadd.f32 %v86, 0.5
  %s88 = scalar_lea.vmem %s1, 144
  %v89 = vld [vmem:[%s88] sm:$0xff]
  %v90 = vld [vmem:[%s88 + $0x8] sm:$0xff]
  %v91 = vld [vmem:[%s88 + $0x10] sm:$0xff]
  %v92 = vld [vmem:[%s88 + $0x18] sm:$0xff]
  %v93 = vld [vmem:[%s88 + $0x20] sm:$0xff]
  %v94 = vld [vmem:[%s88 + $0x28] sm:$0xff]
  %v95 = vld [vmem:[%s88 + $0x30] sm:$0xff]
  %v96 = vld [vmem:[%s88 + $0x38] sm:$0xff]
  %v97 = vld [vmem:[%s88 + $0x40] sm:$0x1]
  %v98 = vperm.slane %v97, 0
  %v100 = vsel %vm22, %v87, 0
  %102 = vmatpush.msra.mxu0 0.0
  %103 = vmatpush.msra.mxu0 0.0
  %104 = vmatpush.msra.mxu0 0.0
  %105 = vmatpush.msra.mxu0 0.0
  %106 = vmatpush.msra.mxu0 0.0
  %107 = vmatpush.msra.mxu0 0.0
  %108 = vmatpush.msra.mxu0 0.0
  %109 = vmatpush.msra.mxu0 0.0
  %110 = vmatpush.msra.mxu0 %v96
  %111 = vmatpush.msra.mxu0 %v95
  %112 = vmatpush.msra.mxu0 %v94
  %113 = vmatpush.msra.mxu0 %v93
  %114 = vmatpush.msra.mxu0 %v92
  %115 = vmatpush.msra.mxu0 %v91
  %116 = vmatpush.msra.mxu0 %v90
  %117 = vmatpush.msra.mxu0 %v89
  %118 = vmatmul.f32.gmra.mxu0 %v100
  %v119 = vpop.f32.mrf.mxu0
  %v120 = vadd.f32 %v98, %v119
  %121 = vdwg.mxu0
  %s122 = scalar_lea.vmem %s1, 216
  %v123 = vld [vmem:[%s122] sm:$0xff]
  %v124 = vld [vmem:[%s122 + $0x8] sm:$0xff]
  %v125 = vld [vmem:[%s122 + $0x10] sm:$0xff]
  %v126 = vld [vmem:[%s122 + $0x18] sm:$0xff]
  %v127 = vld [vmem:[%s122 + $0x20] sm:$0xff]
  %v128 = vld [vmem:[%s122 + $0x28] sm:$0xff]
  %v129 = vld [vmem:[%s122 + $0x30] sm:$0xff]
  %v130 = vld [vmem:[%s122 + $0x38] sm:$0xff]
  %v131 = vld [vmem:[%s122 + $0x40] sm:$0x1]
  %v132 = vperm.slane %v131, 0
  %133 = vmatpush.msra.mxu0 0.0
  %134 = vmatpush.msra.mxu0 0.0
  %135 = vmatpush.msra.mxu0 0.0
  %136 = vmatpush.msra.mxu0 0.0
  %137 = vmatpush.msra.mxu0 0.0
  %138 = vmatpush.msra.mxu0 0.0
  %139 = vmatpush.msra.mxu0 0.0
  %140 = vmatpush.msra.mxu0 0.0
  %141 = vmatpush.msra.mxu0 %v130
  %142 = vmatpush.msra.mxu0 %v129
  %143 = vmatpush.msra.mxu0 %v128
  %144 = vmatpush.msra.mxu0 %v127
  %145 = vmatpush.msra.mxu0 %v126
  %146 = vmatpush.msra.mxu0 %v125
  %147 = vmatpush.msra.mxu0 %v124
  %148 = vmatpush.msra.mxu0 %v123
  %149 = vmatmul.f32.gmra.mxu0 %v100
  %v150 = vpop.f32.mrf.mxu0
  %v151 = vadd.f32 %v132, %v150
  %152 = vdwg.mxu0
  %v153 = vmul.f32 %v151, 0.5
  %v154 = vtanh.pop %v153
  %v155 = vmul.f32 %v154, 0.5
  %v156 = vadd.f32 %v155, 0.5
  %s157 = scalar_lea.vmem %s1, 288
  %v158 = vld [vmem:[%s157] sm:$0xff]
  %v159 = vld [vmem:[%s157 + $0x8] sm:$0xff]
  %v160 = vld [vmem:[%s157 + $0x10] sm:$0xff]
  %v161 = vld [vmem:[%s157 + $0x18] sm:$0xff]
  %v162 = vld [vmem:[%s157 + $0x20] sm:$0xff]
  %v163 = vld [vmem:[%s157 + $0x28] sm:$0xff]
  %v164 = vld [vmem:[%s157 + $0x30] sm:$0xff]
  %v165 = vld [vmem:[%s157 + $0x38] sm:$0xff]
  %v166 = vld [vmem:[%s157 + $0x40] sm:$0x1]
  %v167 = vperm.slane %v166, 0
  %v169 = vsel %vm22, %v156, 0
  %171 = vmatpush.msra.mxu0 0.0
  %172 = vmatpush.msra.mxu0 0.0
  %173 = vmatpush.msra.mxu0 0.0
  %174 = vmatpush.msra.mxu0 0.0
  %175 = vmatpush.msra.mxu0 0.0
  %176 = vmatpush.msra.mxu0 0.0
  %177 = vmatpush.msra.mxu0 0.0
  %178 = vmatpush.msra.mxu0 0.0
  %179 = vmatpush.msra.mxu0 %v165
  %180 = vmatpush.msra.mxu0 %v164
  %181 = vmatpush.msra.mxu0 %v163
  %182 = vmatpush.msra.mxu0 %v162
  %183 = vmatpush.msra.mxu0 %v161
  %184 = vmatpush.msra.mxu0 %v160
  %185 = vmatpush.msra.mxu0 %v159
  %186 = vmatpush.msra.mxu0 %v158
  %187 = vmatmul.f32.gmra.mxu0 %v169
  %v188 = vpop.f32.mrf.mxu0
  %v189 = vadd.f32 %v167, %v188
  %190 = vdwg.mxu0
  %v191 = vmul.f32 %v189, 0.5
  %v192 = vtanh.pop %v191
  %v193 = vmul.f32 %v192, 0.5
  %v194 = vadd.f32 %v193, 0.5
  %s195 = scalar_lea.vmem %s1, 360
  %v196 = vld [vmem:[%s195] sm:$0xff]
  %v197 = vld [vmem:[%s195 + $0x8] sm:$0xff]
  %v198 = vld [vmem:[%s195 + $0x10] sm:$0xff]
  %v199 = vld [vmem:[%s195 + $0x18] sm:$0xff]
  %v200 = vld [vmem:[%s195 + $0x20] sm:$0xff]
  %v201 = vld [vmem:[%s195 + $0x28] sm:$0xff]
  %v202 = vld [vmem:[%s195 + $0x30] sm:$0xff]
  %v203 = vld [vmem:[%s195 + $0x38] sm:$0xff]
  %v204 = vld [vmem:[%s195 + $0x40] sm:$0x1]
  %v205 = vperm.slane %v204, 0
  %v207 = vsel %vm22, %v194, 0
  %209 = vmatpush.msra.mxu0 0.0
  %210 = vmatpush.msra.mxu0 0.0
  %211 = vmatpush.msra.mxu0 0.0
  %212 = vmatpush.msra.mxu0 0.0
  %213 = vmatpush.msra.mxu0 0.0
  %214 = vmatpush.msra.mxu0 0.0
  %215 = vmatpush.msra.mxu0 0.0
  %216 = vmatpush.msra.mxu0 0.0
  %217 = vmatpush.msra.mxu0 %v203
  %218 = vmatpush.msra.mxu0 %v202
  %219 = vmatpush.msra.mxu0 %v201
  %220 = vmatpush.msra.mxu0 %v200
  %221 = vmatpush.msra.mxu0 %v199
  %222 = vmatpush.msra.mxu0 %v198
  %223 = vmatpush.msra.mxu0 %v197
  %224 = vmatpush.msra.mxu0 %v196
  %225 = vmatmul.f32.gmra.mxu0 %v207
  %v226 = vpop.f32.mrf.mxu0
  %v227 = vadd.f32 %v205, %v226
  %228 = vdwg.mxu0
  %v229 = vmul.f32 %v227, 0.5
  %v230 = vtanh.pop %v229
  %v231 = vmul.f32 %v230, 0.5
  %v232 = vadd.f32 %v231, 0.5
  %234 = vrot.lane.b32.xlu0 %v120, 64
  %v235 = vpop.permute.xlu0 %234
  %v237 = vsel %vm22, %v232, %v235
  %238 = vst [vmem:[%s2] sm:$0xff] %v237
  // Predicated region
  $region10: #{autoencoder_forward.1} parent=0 // pred_check
    _
  $region11: #{autoencoder_forward.1} parent=0 // pred_check_branch
    %240 = sbr.rel (0) target = $region13
  $region12: #{autoencoder_forward.1} parent=0 // pred_region
    _
  $region13: #{autoencoder_forward.1} parent=0 // pred_fallthru
    _
  // Predicated region
  $region14: #{autoencoder_forward.1} parent=0 // pred_check
    _
  $region15: #{autoencoder_forward.1} parent=0 // pred_check_branch
    %242 = sbr.rel (0) target = $region17
  $region16: #{autoencoder_forward.1} parent=0 // pred_region
    _
  $region17: #{autoencoder_forward.1} parent=0 // pred_fallthru
    _

</llo_original>
